<compile_context>
chip_gen: v7x
topology: tpu7x:2x2x1
jax: 0.10.0
libtpu: 0.0.40
codegen_flags: <defaults>
</compile_context>

<pallas_src>
import functools

import jax
import jax.numpy as jnp
from jax import lax
from jax.experimental import pallas as pl
from jax.experimental.pallas import tpu as pltpu


def _round_up(x, m):
    return ((x + m - 1) // m) * m


def _fixmatch_ce_kernel(*refs, n_rows, has_mask):
    logits_ref = refs[0]
    targets_ref = refs[1]
    mask_ref = refs[2] if has_mask else None
    out_ref = refs[-1]

    logits = logits_ref[...].astype(jnp.float32)          # (tile_n, C), upcast in-kernel
    tgt = targets_ref[...]                                 # (tile_n, 1) int32
    tn, c = logits.shape

    # numerically-stable log-sum-exp; reuse the shifted logits for the target pick
    row_max = jnp.max(logits, axis=-1, keepdims=True)      # (tile_n, 1)
    shifted = logits - row_max                              # (tile_n, C)
    sum_exp = jnp.sum(jnp.exp(shifted), axis=-1, keepdims=True)   # (tile_n, 1)

    # gather shifted logit at the target index via one-hot select (no dynamic gather on TPU)
    col_ids = lax.broadcasted_iota(jnp.int32, (tn, c), 1)   # (tile_n, C)
    picked = jnp.sum(jnp.where(col_ids == tgt, shifted, 0.0),
                     axis=-1, keepdims=True)                # (tile_n, 1)

    ce = jnp.log(sum_exp) - picked                          # per-sample CE (tile_n, 1)

    # zero-weight rows that are padding (N rounded up to a multiple of tile_n)
    row_ids = pl.program_id(0) * tn + lax.broadcasted_iota(jnp.int32, (tn, 1), 0)
    weight = (row_ids < n_rows).astype(jnp.float32)         # (tile_n, 1)
    if has_mask:
        weight = weight * mask_ref[...].astype(jnp.float32)

    partial = jnp.sum(ce * weight)                          # scalar partial sum for this tile

    # lane-dense unmasked store of the per-tile partial (wrapper reads [:, 0, 0])
    out_ref[...] = jnp.full(out_ref.shape, partial, dtype=jnp.float32)


def fixmatch_cross_entropy(outputs, targets, mask=None, *, block_rows=512):
    """outputs: (N, C) float logits (f32 or bf16); targets: (N,) int ids; mask: (N,) float or None."""
    n, c = outputs.shape

    tile_n = min(block_rows, _round_up(n, 8))
    n_pad = _round_up(n, tile_n)
    num_tiles = n_pad // tile_n

    logits = outputs
    targets2d = targets.astype(jnp.int32).reshape(n, 1)
    if n_pad != n:
        logits = jnp.pad(logits, ((0, n_pad - n), (0, 0)))
        targets2d = jnp.pad(targets2d, ((0, n_pad - n), (0, 0)))

    has_mask = mask is not None
    args = [logits, targets2d]
    in_specs = [
        pl.BlockSpec((tile_n, c), lambda i: (i, 0)),
        pl.BlockSpec((tile_n, 1), lambda i: (i, 0)),
    ]
    if has_mask:
        mask2d = mask.astype(jnp.float32).reshape(n, 1)
        if n_pad != n:
            mask2d = jnp.pad(mask2d, ((0, n_pad - n), (0, 0)))
        args.append(mask2d)
        in_specs.append(pl.BlockSpec((tile_n, 1), lambda i: (i, 0)))

    kernel = functools.partial(_fixmatch_ce_kernel, n_rows=n, has_mask=has_mask)

    partials = pl.pallas_call(
        kernel,
        out_shape=jax.ShapeDtypeStruct((num_tiles, 8, 128), jnp.float32),
        grid=(num_tiles,),
        in_specs=in_specs,
        out_specs=pl.BlockSpec((1, 8, 128), lambda i: (i, 0, 0)),
        compiler_params=pltpu.CompilerParams(
            dimension_semantics=("parallel",),
        ),
    )(*args)

    return jnp.sum(partials[:, 0, 0]) / jnp.float32(n)


def _reference(outputs, targets, mask=None):
    # pure-JAX reference for sanity checking
    logp = jax.nn.log_softmax(outputs.astype(jnp.float32), axis=-1)
    ce = -jnp.take_along_axis(logp, targets[:, None].astype(jnp.int32), axis=-1)[:, 0]
    if mask is None:
        return jnp.mean(ce)
    return jnp.mean(ce * mask.astype(jnp.float32))


if __name__ == "__main__":
    key = jax.random.PRNGKey(0)
    k1, k2, k3, k4, k5 = jax.random.split(key, 5)

    # small shapes consistent with the module: batch=8 samples, 32 classes
    N, C = 8, 32
    outputs = jax.random.normal(k1, (N, C), dtype=jnp.float32)
    targets = jax.random.randint(k2, (N,), 0, C, dtype=jnp.int32)
    mask = (jax.random.uniform(k3, (N,)) > 0.5).astype(jnp.float32)

    # masked path (reduction='none' * mask, then mean)
    loss_masked = fixmatch_cross_entropy(outputs, targets, mask)
    jax.block_until_ready(loss_masked)
    ref_masked = _reference(outputs, targets, mask)
    assert jnp.allclose(loss_masked, ref_masked, atol=1e-5, rtol=1e-5), (loss_masked, ref_masked)

    # unmasked path (reduction='mean')
    loss_plain = fixmatch_cross_entropy(outputs, targets, None)
    jax.block_until_ready(loss_plain)
    ref_plain = _reference(outputs, targets, None)
    assert jnp.allclose(loss_plain, ref_plain, atol=1e-5, rtol=1e-5), (loss_plain, ref_plain)

    # bf16 logits stay bf16 in HBM; kernel upcasts on load
    outputs_bf16 = outputs.astype(jnp.bfloat16)
    loss_bf16 = fixmatch_cross_entropy(outputs_bf16, targets, mask)
    jax.block_until_ready(loss_bf16)
    ref_bf16 = _reference(outputs_bf16.astype(jnp.float32), targets, mask)
    assert jnp.allclose(loss_bf16, ref_bf16, atol=1e-3, rtol=1e-3), (loss_bf16, ref_bf16)

    # multi-tile + padded-remainder path: N=20 rows with 8-row tiles -> 3 tiles, 4 pad rows
    N2, C2 = 20, 48
    outputs2 = jax.random.normal(k4, (N2, C2), dtype=jnp.float32)
    targets2 = jax.random.randint(k5, (N2,), 0, C2, dtype=jnp.int32)
    loss_tiled = fixmatch_cross_entropy(outputs2, targets2, None, block_rows=8)
    jax.block_until_ready(loss_tiled)
    ref_tiled = _reference(outputs2, targets2, None)
    assert jnp.allclose(loss_tiled, ref_tiled, atol=1e-5, rtol=1e-5), (loss_tiled, ref_tiled)

    print("KERNEL_OK")
</pallas_src>

<mosaic_0001>
module attributes {stable_mosaic.version = 11 : i64} {
  func.func @_fixmatch_ce_kernel(%arg0: i32, %arg1: memref<8x32xf32, #tpu.memory_space<vmem>>, %arg2: memref<8x1xi32, #tpu.memory_space<vmem>>, %arg3: memref<8x1xf32, #tpu.memory_space<vmem>>, %arg4: memref<1x8x128xf32, #tpu.memory_space<vmem>>) attributes {dimension_semantics = [#tpu.dimension_semantics<parallel>], iteration_bounds = array<i64: 1>, scalar_prefetch = 0 : i64, scratch_operands = 0 : i64, tpu.core_type = #tpu.core_type<tc>, window_params = [{transform_indices = @transform_0, window_bounds = array<i64: 8, 32>}, {transform_indices = @transform_1, window_bounds = array<i64: 8, 1>}, {transform_indices = @transform_2, window_bounds = array<i64: 8, 1>}, {transform_indices = @transform_3, window_bounds = array<i64: 1, 8, 128>}]} {
    %c0 = arith.constant 0 : index
    %c0_0 = arith.constant 0 : index
    %0 = vector.load %arg1[%c0, %c0_0] : memref<8x32xf32, #tpu.memory_space<vmem>>, vector<8x32xf32>
    %c0_1 = arith.constant 0 : index
    %c0_2 = arith.constant 0 : index
    %1 = vector.load %arg2[%c0_1, %c0_2] : memref<8x1xi32, #tpu.memory_space<vmem>>, vector<8x1xi32>
    %cst = arith.constant dense<0xFF800000> : vector<8xf32>
    %2 = vector.multi_reduction <maximumf>, %0, %cst [1] : vector<8x32xf32> to vector<8xf32>
    %3 = vector.shape_cast %2 : vector<8xf32> to vector<8x1xf32>
    %4 = vector.broadcast %3 : vector<8x1xf32> to vector<8x32xf32>
    %5 = arith.subf %0, %4 : vector<8x32xf32>
    %6 = math.exp %5 : vector<8x32xf32>
    %cst_3 = arith.constant dense<0.000000e+00> : vector<8xf32>
    %7 = vector.multi_reduction <add>, %6, %cst_3 [1] : vector<8x32xf32> to vector<8xf32>
    %8 = vector.shape_cast %7 : vector<8xf32> to vector<8x1xf32>
    %9 = tpu.iota {dimensions = array<i32: 1>} : vector<8x32xi32>
    %10 = vector.broadcast %1 : vector<8x1xi32> to vector<8x32xi32>
    %11 = arith.cmpi eq, %9, %10 : vector<8x32xi32>
    %cst_4 = arith.constant 0.000000e+00 : f32
    %12 = vector.broadcast %cst_4 : f32 to vector<8x32xf32>
    %13 = arith.select %11, %5, %12 : vector<8x32xi1>, vector<8x32xf32>
    %cst_5 = arith.constant dense<0.000000e+00> : vector<8xf32>
    %14 = vector.multi_reduction <add>, %13, %cst_5 [1] : vector<8x32xf32> to vector<8xf32>
    %15 = vector.shape_cast %14 : vector<8xf32> to vector<8x1xf32>
    %16 = math.log %8 : vector<8x1xf32>
    %17 = arith.subf %16, %15 : vector<8x1xf32>
    %c8_i32 = arith.constant 8 : i32
    %18 = arith.muli %arg0, %c8_i32 : i32
    %19 = tpu.iota {dimensions = array<i32: 0>} : vector<8x1xi32>
    %20 = vector.broadcast %18 : i32 to vector<8x1xi32>
    %21 = arith.addi %20, %19 : vector<8x1xi32>
    %c8_i32_6 = arith.constant 8 : i32
    %22 = vector.broadcast %c8_i32_6 : i32 to vector<8x1xi32>
    %23 = arith.cmpi slt, %21, %22 : vector<8x1xi32>
    %24 = arith.extui %23 : vector<8x1xi1> to vector<8x1xi32>
    %25 = arith.sitofp %24 : vector<8x1xi32> to vector<8x1xf32>
    %c0_7 = arith.constant 0 : index
    %c0_8 = arith.constant 0 : index
    %26 = vector.load %arg3[%c0_7, %c0_8] : memref<8x1xf32, #tpu.memory_space<vmem>>, vector<8x1xf32>
    %27 = arith.mulf %25, %26 : vector<8x1xf32>
    %28 = arith.mulf %17, %27 : vector<8x1xf32>
    %29 = vector.shape_cast %28 : vector<8x1xf32> to vector<1x8x1xf32>
    %cst_9 = arith.constant dense<0.000000e+00> : vector<1xf32>
    %30 = vector.multi_reduction <add>, %29, %cst_9 [1, 2] : vector<1x8x1xf32> to vector<1xf32>
    %31 = vector.shape_cast %30 : vector<1xf32> to vector<1x1x1xf32>
    %32 = vector.extract %31[0, 0, 0] : f32 from vector<1x1x1xf32>
    %33 = vector.broadcast %32 : f32 to vector<1x8x128xf32>
    %c0_10 = arith.constant 0 : index
    %c0_11 = arith.constant 0 : index
    %c0_12 = arith.constant 0 : index
    %34 = vector.load %arg4[%c0_10, %c0_11, %c0_12] : memref<1x8x128xf32, #tpu.memory_space<vmem>>, vector<1x8x128xf32>
    tpu.vector_store %arg4[%c0_10, %c0_11, %c0_12], %33 {strides = array<i32>} : memref<1x8x128xf32, #tpu.memory_space<vmem>>, vector<1x8x128xf32>,
    return
  }
  func.func @transform_0(%arg0: i32) -> (i32, i32) {
    %c0_i32 = arith.constant 0 : i32
    %c0_i32_0 = arith.constant 0 : i32
    return %arg0, %c0_i32 : i32, i32
  }
  func.func @transform_1(%arg0: i32) -> (i32, i32) {
    %c0_i32 = arith.constant 0 : i32
    %c0_i32_0 = arith.constant 0 : i32
    return %arg0, %c0_i32 : i32, i32
  }
  func.func @transform_2(%arg0: i32) -> (i32, i32) {
    %c0_i32 = arith.constant 0 : i32
    %c0_i32_0 = arith.constant 0 : i32
    return %arg0, %c0_i32 : i32, i32
  }
  func.func @transform_3(%arg0: i32) -> (i32, i32, i32) {
    %c0_i32 = arith.constant 0 : i32
    %c0_i32_0 = arith.constant 0 : i32
    %c0_i32_1 = arith.constant 0 : i32
    return %arg0, %c0_i32, %c0_i32_0 : i32, i32, i32
  }
}

</mosaic_0001>

<llo_original>
// kernel: tpu_custom_call.1
$region0: #{tpu_custom_call.1}
  #allocation0 [shape = 'u32[]', space=smem, size = 0x4, offset = 0x4, fixed_abs, tag = 'smem constant byte address 0x4 - core index']
  #allocation1 [shape = 'u32[144,128]{1,0:T(1,128)}', space=vmem, size = 0x12000, scoped, tag = 'internal scratch']
  %s0 = inlined_call_operand.vmem [shape: f32[8,32], index: 0, kind: input, shape index: {}]
  %s1 = inlined_call_operand.vmem [shape: s32[8,1], index: 1, kind: input, shape index: {}]
  %s2 = inlined_call_operand.vmem [shape: f32[8,1], index: 2, kind: input, shape index: {}]
  %s3 = inlined_call_operand.hbm [shape: f32[1,8,128], index: 3, kind: output, shape index: {}]
  %s4 = sld [smem:[#allocation0]]
  $region22: #{tpu_custom_call.1} parent=0
    _
  %s6 = ssub.s32 1, %s4
  %s7 = scalar_select 0, %s6, %s4
  $region1: #{tpu_custom_call.1} parent=0
    #allocation2 [shape = 'u8[4096]{0}', space=vmem, size = 0x1000, scoped, tag = 'output window, operand 0, single buffered']
    #allocation3 [shape = 's32[1]{0}', space=sflag, size = 0x4, scoped, tag = 'scoped memory for tpu_custom_call.1']
    %8 = vsyncpa [#allocation3], 0
    // Predicated region
    $region2: #{tpu_custom_call.1} parent=1 // pred_check
      _
    $region3: #{tpu_custom_call.1} parent=1 // pred_check_branch
      %10 = sbr.rel (0) target = $region5
    $region4: #{tpu_custom_call.1} parent=1 // pred_region
      _
    $region5: #{tpu_custom_call.1} parent=1 // pred_fallthru
      _
    // Predicated region
    $region6: #{tpu_custom_call.1} parent=1 // pred_check
      _
    $region7: #{tpu_custom_call.1} parent=1 // pred_check_branch
      %12 = sbr.rel (0) target = $region9
    $region8: #{tpu_custom_call.1} parent=1 // pred_region
      _
    $region9: #{tpu_custom_call.1} parent=1 // pred_fallthru
      _
    // Predicated region
    $region10: #{tpu_custom_call.1} parent=1 // pred_check
      _
    $region11: #{tpu_custom_call.1} parent=1 // pred_check_branch
      %14 = sbr.rel (0) target = $region13
    $region12: #{tpu_custom_call.1} parent=1 // pred_region
      _
    $region13: #{tpu_custom_call.1} parent=1 // pred_fallthru
      _
    %v15 = vld [vmem:[%s0] sm:$0xff]
    %v16 = vld [vmem:[%s1] sm:$0xff]
    %vm17 = vcmask 261120
    %v18 = vsel %vm17, %v15, -inf
    %19 = vmax.xlane.f32.xlu0 %v18
    %v20 = vpop.xlane.xlu0 %19
    %v21 = vsub.f32 %v15, %v20
    %v22 = vmul.f32 %v21, 1.442695
    %v23 = vpow.pop %v22
    %v24 = vsel %vm17, %v23, 0.0
    %25 = vadd.xlane.f32.xlu0 %v24
    %v26 = vpop.xlane.xlu0 %25
    %v27 = vlaneseq
    %v28 = vand.u32 %v27, 127
    %29 = vset.pattern.permute.xlu0 0
    %30 = vperm.xlu0 %29, %v16
    %v31 = vpop.permute.xlu0 %30
    %vm32 = vcmp.eq.s32.totalorder %v28, %v31
    %v33 = vsel %vm32, %v21, 0.0
    %v34 = vsel %vm17, %v33, 0.0
    %35 = vadd.xlane.f32.xlu0 %v34
    %v36 = vpop.xlane.xlu0 %35
    %v37 = vlog2.pop %v26
    %v38 = vmul.f32 %v37, 0.6931472
    %v39 = vsub.f32 %v38, %v36
    %s40 = smul.u32 0, 8
    %v41 = vlaneseq
    %v42 = vshrl.u32 %v41, 7
    %v43 = vstv %s40
    %v44 = vadd.s32 %v43, %v42
    %vm45 = vcmp.lt.s32.totalorder %v44, 8
    %v46 = vsel %vm45, 1, 0
    %v47 = vcvt.s32.f32 %v46
    %v48 = vld [vmem:[%s2] sm:$0xff]
    %v49 = vmul.f32 %v47, %v48
    %v50 = vmul.f32 %v39, %v49
    %vm51 = vcmask 7168
    %v52 = vsel %vm51, %v50, 0.0
    %53 = vadd.xlane.f32.xlu0 %v52
    %v54 = vpop.xlane.xlu0 %53
    %v55 = vrot.slane %v54, 4
    %v56 = vadd.f32 %v54, %v55
    %v57 = vrot.slane %v56, 2
    %v58 = vadd.f32 %v56, %v57
    %v59 = vrot.slane %v58, 1
    %v60 = vadd.f32 %v58, %v59
    %s61 = vtos %v60
    %v62 = vstv %s61
    %63 = vst [vmem:[#allocation2] sm:$0xff] %v62
    // Predicated region
    $region14: #{tpu_custom_call.1} parent=1 // pred_check
      _
    $region15: #{tpu_custom_call.1} parent=1 // pred_check_branch
      %65 = sbr.rel (0) target = $region17
    $region16: #{tpu_custom_call.1} parent=1 // pred_region
      %s67 = ssub.s32 128, 128
      %68 = vsyncadd [#allocation3], %s67
      %s70 = sshll.u32 [#allocation2], 4
      %s71 = int_to_ptr.vmem [resolvable:$true] %s70
      %73 = dma.vmem_to_hbm [thread:$0]  %s71, 128, %s3, [#allocation3]
    $region17: #{tpu_custom_call.1} parent=1 // pred_fallthru
      _
    // Predicated region
    $region18: #{tpu_custom_call.1} parent=1 // pred_check
      _
    $region19: #{tpu_custom_call.1} parent=1 // pred_check_branch
      %75 = sbr.rel (0) target = $region21
    $region20: #{tpu_custom_call.1} parent=1 // pred_region
      %76 = dma.done [#allocation3], 128
    $region21: #{tpu_custom_call.1} parent=1 // pred_fallthru
      _
    %77 = vsyncpa [#allocation3], 1

</llo_original>
